<compile_context>
chip_gen: v7x
topology: tpu7x:2x2x1
jax: 0.10.0
libtpu: 0.0.40
codegen_flags: <defaults>
</compile_context>

<pallas_src>
import functools

import jax
import jax.numpy as jnp
from jax import lax
from jax.experimental import pallas as pl
from jax.experimental.pallas import tpu as pltpu

_LANE = 128
_MIB = 1024 * 1024


def _row_mean_kernel(x_ref, o_ref, acc_ref, *, inv_l, l, tl, mask_l):
    """Grid = (row tiles [parallel], L tiles [arbitrary / reduction])."""
    k = pl.program_id(1)

    @pl.when(k == 0)
    def _():
        acc_ref[...] = jnp.zeros_like(acc_ref)

    x = x_ref[...]                                         # (TM, TL) tile
    if mask_l:
        # Last L tile can run past L; the out-of-bounds lanes of a partial
        # block are unspecified, so zero them before accumulating.
        lane = lax.broadcasted_iota(jnp.int32, x.shape, dimension=1)
        x = jnp.where(k * tl + lane < l, x, jnp.zeros_like(x))

    # f32 accumulate; cross-lane reduce stays on the VPU/XLU (no MXU routing).
    acc_ref[...] += jnp.sum(x, axis=-1, dtype=jnp.float32).reshape(1, -1)

    @pl.when(k == pl.num_programs(1) - 1)
    def _():
        o_ref[...] = (acc_ref[...] * inv_l).astype(o_ref.dtype)


def _target_tile_bytes() -> int:
    """Per-input-block byte budget, generation aware."""
    vmem_bytes = 128 * _MIB
    try:
        vmem_bytes = int(pltpu.get_tpu_info().vmem_capacity_bytes)
    except Exception:  # conservative fallback (e.g. interpret mode / CPU)
        pass
    # v7x-class parts (64 MiB VMEM/core) have ~2.3x the HBM BW of v6e: bigger
    # tiles keep the fixed ~0.35us per-grid-step overhead <10% of drain time,
    # and 2 x 8 MiB double-buffered still fits the 32 MiB scoped default.
    if vmem_bytes <= 64 * _MIB:
        return 8 * _MIB
    return 4 * _MIB


def _choose_tiles(rows: int, l: int, itemsize: int, target_bytes: int):
    """Pick (block_rows, block_len) for the flattened (rows, L) input.

    Constraints: block_rows is a multiple of 128 or == rows (lane-dense
    (1, tm) output store + (8,128) input tiling); block_len is a multiple of
    128 or == L.  Aims for ~target_bytes per input block while producing
    enough row tiles to pipeline the DMA and occupy both v7x TensorCores.
    """
    row_bytes = l * itemsize
    total_bytes = rows * row_bytes

    # ---- rows per tile ----------------------------------------------------
    if rows <= _LANE:
        tm = rows                                   # full extent
    else:
        budget_rows = min(rows, max(1, target_bytes // max(1, row_bytes)))
        tm = max(_LANE, (budget_rows // _LANE) * _LANE)
        # Multi-MiB inputs: keep >=2 (ideally up to 8) row tiles so the grid
        # pipelines and shards across both v7x TensorCores, with tiles kept
        # around >= ~2 MiB where possible.
        if total_bytes >= 2 * _MIB:
            want_steps = min(8, rows // _LANE, max(2, total_bytes // (2 * _MIB)))
            if want_steps >= 2:
                tm_steps = max(_LANE, ((rows // want_steps) // _LANE) * _LANE)
                tm = min(tm, tm_steps)

    # ---- L per tile ---------------------------------------------------------
    if l <= _LANE or tm * row_bytes <= target_bytes:
        tl = l                                      # whole row fits the budget
    else:
        tl_cap = target_bytes // max(1, tm * itemsize)
        tl = max(_LANE, (tl_cap // _LANE) * _LANE)
        if tl >= l:
            tl = l
    return tm, tl


def adaptive_concat_pool1d(x: jax.Array, *, use_kernel=None,
                           block_rows=None, block_len=None) -> jax.Array:
    """x: (N, C, L) -> (N, 2*C, 1); both halves are the mean over L."""
    n, c, l = x.shape
    rows = n * c
    itemsize = x.dtype.itemsize
    total_bytes = rows * l * itemsize

    if use_kernel is None:
        # Tiny inputs / very short rows: the fixed pallas_call launch plus
        # lane under-utilisation loses to an XLA-fused reduction.
        use_kernel = (total_bytes >= _MIB) and (l >= _LANE)

    if not use_kernel:
        mean = jnp.mean(x.astype(jnp.float32), axis=-1, keepdims=True)
        mean = mean.astype(x.dtype)
        return jnp.concatenate([mean, mean], axis=1)

    x2 = x.reshape(rows, l)                         # free, row-major unchanged

    tm, tl = _choose_tiles(rows, l, itemsize, _target_tile_bytes())
    if block_rows is not None:
        tm = block_rows
    if block_len is not None:
        tl = block_len

    grid = (pl.cdiv(rows, tm), pl.cdiv(l, tl))
    mask_l = (tl < l) and (l % tl != 0)

    in_tile_bytes = tm * tl * itemsize
    # 2x double-buffered input tiles + tiny output/scratch + compiler headroom;
    # explicit so enlarged tiles also compile on v5e's 16 MiB scoped default,
    # capped well under v7x's 64 MiB physical VMEM.
    vmem_limit = int(min(56 * _MIB, max(32 * _MIB, 2 * in_tile_bytes + 8 * _MIB)))

    kernel = functools.partial(
        _row_mean_kernel, inv_l=1.0 / l, l=l, tl=tl, mask_l=mask_l)

    cost = pl.CostEstimate(
        flops=rows * (l + 1),
        transcendentals=0,
        bytes_accessed=rows * l * itemsize + rows * itemsize,
    )

    means = pl.pallas_call(
        kernel,
        out_shape=jax.ShapeDtypeStruct((1, rows), x.dtype),
        grid=grid,
        in_specs=[pl.BlockSpec((tm, tl), lambda i, k: (i, k))],
        out_specs=pl.BlockSpec((1, tm), lambda i, k: (0, i)),
        scratch_shapes=[pltpu.VMEM((1, tm), jnp.float32)],
        compiler_params=pltpu.CompilerParams(
            dimension_semantics=("parallel", "arbitrary"),
            vmem_limit_bytes=vmem_limit,
        ),
        cost_estimate=cost,
    )(x2)

    mean = means.reshape(n, c, 1)
    # torch.cat([ap(x), mp(x)], dim=1) with both branches being AvgPool:
    # duplicate the (N, C, 1) means along the channel axis outside the kernel.
    return jnp.concatenate([mean, mean], axis=1)


def _reference(x: jax.Array) -> jax.Array:
    mean = jnp.mean(x, axis=-1, keepdims=True)
    return jnp.concatenate([mean, mean], axis=1)


if __name__ == "__main__":
    key = jax.random.PRNGKey(0)
    k1, k2, k3 = jax.random.split(key, 3)

    # 1) Small shape matching the module's (N, C, L) convention: fast path.
    x1 = jax.random.normal(k1, (2, 4, 16), dtype=jnp.float32)
    out1 = jax.block_until_ready(adaptive_concat_pool1d(x1))
    assert out1.shape == (2, 8, 1), out1.shape
    assert jnp.allclose(out1, _reference(x1), atol=1e-5, rtol=1e-5)

    # 2) Same small shape, forcing the Pallas kernel path.
    out1k = jax.block_until_ready(adaptive_concat_pool1d(x1, use_kernel=True))
    assert jnp.allclose(out1k, _reference(x1), atol=1e-5, rtol=1e-5)

    # 3) L not a multiple of 128 with a tiled L-reduction: exercises the
    #    partial-last-block lane masking in the accumulator loop.
    x2 = jax.random.normal(k2, (2, 8, 130), dtype=jnp.float32)
    out2 = jax.block_until_ready(
        adaptive_concat_pool1d(x2, use_kernel=True, block_len=128))
    assert out2.shape == (2, 16, 1), out2.shape
    assert jnp.allclose(out2, _reference(x2), atol=1e-5, rtol=1e-5)

    # 4) Moderate shape taking the automatic kernel path (multi-row-tile grid).
    x3 = jax.random.normal(k3, (2, 512, 1024), dtype=jnp.float32)
    out3 = jax.block_until_ready(adaptive_concat_pool1d(x3))
    assert out3.shape == (2, 1024, 1), out3.shape
    assert jnp.allclose(out3, _reference(x3), atol=1e-4, rtol=1e-4)

    print("KERNEL_OK")
</pallas_src>

<mosaic_0001>
module attributes {stable_mosaic.version = 11 : i64} {
  func.func @_row_mean_kernel(%arg0: i32, %arg1: i32, %arg2: memref<8x16xf32, #tpu.memory_space<vmem>>, %arg3: memref<1x8xf32, #tpu.memory_space<vmem>>, %arg4: memref<1x8xf32, #tpu.memory_space<vmem>>) attributes {dimension_semantics = [#tpu.dimension_semantics<parallel>, #tpu.dimension_semantics<arbitrary>], iteration_bounds = array<i64: 1, 1>, scalar_prefetch = 0 : i64, scratch_operands = 1 : i64, tpu.core_type = #tpu.core_type<tc>, window_params = [{transform_indices = @transform_0, window_bounds = array<i64: 8, 16>}, {transform_indices = @transform_1, window_bounds = array<i64: 1, 8>}]} {
    %c0_i32 = arith.constant 0 : i32
    %0 = arith.cmpi eq, %arg1, %c0_i32 : i32
    %1 = arith.extui %0 : i1 to i32
    %c0_i32_0 = arith.constant 0 : i32
    %2 = arith.cmpi ne, %1, %c0_i32_0 : i32
    scf.if %2 {
      %cst_8 = arith.constant 0.000000e+00 : f32
      %12 = vector.broadcast %cst_8 : f32 to vector<1x8xf32>
      %c0_9 = arith.constant 0 : index
      %c0_10 = arith.constant 0 : index
      %13 = vector.load %arg4[%c0_9, %c0_10] : memref<1x8xf32, #tpu.memory_space<vmem>>, vector<1x8xf32>
      tpu.vector_store %arg4[%c0_9, %c0_10], %12 {strides = array<i32>} : memref<1x8xf32, #tpu.memory_space<vmem>>, vector<1x8xf32>,
    } else {
    }
    %c0 = arith.constant 0 : index
    %c0_1 = arith.constant 0 : index
    %3 = vector.load %arg2[%c0, %c0_1] : memref<8x16xf32, #tpu.memory_space<vmem>>, vector<8x16xf32>
    %c0_2 = arith.constant 0 : index
    %c0_3 = arith.constant 0 : index
    %4 = vector.load %arg4[%c0_2, %c0_3] : memref<1x8xf32, #tpu.memory_space<vmem>>, vector<1x8xf32>
    %cst = arith.constant dense<0.000000e+00> : vector<8xf32>
    %5 = vector.multi_reduction <add>, %3, %cst [1] : vector<8x16xf32> to vector<8xf32>
    %6 = vector.shape_cast %5 : vector<8xf32> to vector<1x8xf32>
    %7 = arith.addf %4, %6 : vector<1x8xf32>
    %c0_4 = arith.constant 0 : index
    %c0_5 = arith.constant 0 : index
    %8 = vector.load %arg4[%c0_4, %c0_5] : memref<1x8xf32, #tpu.memory_space<vmem>>, vector<1x8xf32>
    tpu.vector_store %arg4[%c0_4, %c0_5], %7 {strides = array<i32>} : memref<1x8xf32, #tpu.memory_space<vmem>>, vector<1x8xf32>,
    %c0_i32_6 = arith.constant 0 : i32
    %9 = arith.cmpi eq, %arg1, %c0_i32_6 : i32
    %10 = arith.extui %9 : i1 to i32
    %c0_i32_7 = arith.constant 0 : i32
    %11 = arith.cmpi ne, %10, %c0_i32_7 : i32
    scf.if %11 {
      %c0_8 = arith.constant 0 : index
      %c0_9 = arith.constant 0 : index
      %12 = vector.load %arg4[%c0_8, %c0_9] : memref<1x8xf32, #tpu.memory_space<vmem>>, vector<1x8xf32>
      %cst_10 = arith.constant 6.250000e-02 : f32
      %13 = vector.broadcast %cst_10 : f32 to vector<1x8xf32>
      %14 = arith.mulf %12, %13 : vector<1x8xf32>
      %c0_11 = arith.constant 0 : index
      %c0_12 = arith.constant 0 : index
      %15 = vector.load %arg3[%c0_11, %c0_12] : memref<1x8xf32, #tpu.memory_space<vmem>>, vector<1x8xf32>
      tpu.vector_store %arg3[%c0_11, %c0_12], %14 {strides = array<i32>} : memref<1x8xf32, #tpu.memory_space<vmem>>, vector<1x8xf32>,
    } else {
    }
    return
  }
  func.func @transform_0(%arg0: i32, %arg1: i32) -> (i32, i32) {
    %c0_i32 = arith.constant 0 : i32
    return %arg0, %arg1 : i32, i32
  }
  func.func @transform_1(%arg0: i32, %arg1: i32) -> (i32, i32) {
    %c0_i32 = arith.constant 0 : i32
    %c0_i32_0 = arith.constant 0 : i32
    return %c0_i32, %arg0 : i32, i32
  }
}

</mosaic_0001>

<llo_original>
// kernel: tpu_custom_call.1
$region0: #{tpu_custom_call.1}
  #allocation0 [shape = 'u32[]', space=smem, size = 0x4, offset = 0x4, fixed_abs, tag = 'smem constant byte address 0x4 - core index']
  #allocation1 [shape = 'u32[144,128]{1,0:T(1,128)}', space=vmem, size = 0x12000, scoped, tag = 'internal scratch']
  #allocation2 [shape = 'f32[1,8]{1,0:T(1,128)}', space=vmem, size = 0x200, scoped, tag = 'scratch operand']
  %s0 = inlined_call_operand.hbm [shape: f32[8,16], index: 0, kind: input, shape index: {}]
  %s1 = inlined_call_operand.hbm [shape: f32[1,8], index: 1, kind: output, shape index: {}]
  %s2 = sld [smem:[#allocation0]]
  $region26: #{tpu_custom_call.1} parent=0
    _
  %s4 = ssub.s32 1, %s2
  %s5 = scalar_select 0, %s4, %s2
  $region1: #{tpu_custom_call.1} parent=0
    #allocation3 [shape = 'u8[4096]{0}', space=vmem, size = 0x1000, scoped, tag = 'input window, operand 0, single buffered']
    #allocation4 [shape = 's32[1]{0}', space=sflag, size = 0x4, scoped, tag = 'scoped memory for tpu_custom_call.1']
    #allocation5 [shape = 's32[1]{0}', space=sflag, size = 0x4, scoped, tag = 'scoped memory for tpu_custom_call.1']
    #allocation6 [shape = 'u8[512]{0}', space=vmem, size = 0x400, scoped, tag = 'output window, operand 0, single buffered']
    %6 = vsyncpa [#allocation4], 0
    %7 = vsyncpa [#allocation5], 0
    // Predicated region
    $region2: #{tpu_custom_call.1} parent=1 // pred_check
      _
    $region3: #{tpu_custom_call.1} parent=1 // pred_check_branch
      %9 = sbr.rel (0) target = $region5
    $region4: #{tpu_custom_call.1} parent=1 // pred_region
      %s11 = ssub.s32 128, 128
      %12 = vsyncadd [#allocation4], %s11
      %s14 = sshll.u32 [#allocation3], 4
      %s15 = int_to_ptr.vmem [resolvable:$true] %s14
      %17 = dma.hbm_to_vmem [thread:$0]  %s0, 128, %s15, [#allocation4]
    $region5: #{tpu_custom_call.1} parent=1 // pred_fallthru
      _
    // Predicated region
    $region6: #{tpu_custom_call.1} parent=1 // pred_check
      _
    $region7: #{tpu_custom_call.1} parent=1 // pred_check_branch
      %19 = sbr.rel (0) target = $region9
    $region8: #{tpu_custom_call.1} parent=1 // pred_region
      %20 = dma.done [#allocation4], 128
    $region9: #{tpu_custom_call.1} parent=1 // pred_fallthru
      _
    %p21 = scmp.eq.s32.totalorder 0, 0
    // Predicated region
    $region10: #{tpu_custom_call.1} parent=1 // pred_check
      %p22 = pneg %p21
    $region11: #{tpu_custom_call.1} parent=1 // pred_check_branch
      %24 = sbr.rel (%p22) target = $region13
    $region12: #{tpu_custom_call.1} parent=1 // pred_region
      %vm25 = vcmask 57344
      %26 = vst.msk [vmem:[#allocation2] sm:$0x1] %vm25, 0.0
    $region13: #{tpu_custom_call.1} parent=1 // pred_fallthru
      _
    %v27 = vld [vmem:[#allocation3] sm:$0xff]
    %v28 = vld [vmem:[#allocation2] sm:$0x1]
    %vm29 = vcmask 130048
    %v30 = vsel %vm29, %v27, 0.0
    %31 = vadd.xlane.f32.xlu0 %v30
    %v32 = vpop.xlane.xlu0 %31
    %v34 = vlaneseq
    %v35 = vshrl.u32 %v34, 7
    %v36 = vsub.s32 0, %v35
    %v37 = vrot.slane %v32, %v36
    %v38 = vlaneseq
    %v39 = vshrl.u32 %v38, 7
    %v40 = vsub.s32 1, %v39
    %v41 = vrot.slane %v32, %v40
    %v42 = vlaneseq
    %v43 = vshrl.u32 %v42, 7
    %v44 = vsub.s32 2, %v43
    %v45 = vrot.slane %v32, %v44
    %v46 = vlaneseq
    %v47 = vshrl.u32 %v46, 7
    %v48 = vsub.s32 3, %v47
    %v49 = vrot.slane %v32, %v48
    %v50 = vlaneseq
    %v51 = vshrl.u32 %v50, 7
    %v52 = vsub.s32 4, %v51
    %v53 = vrot.slane %v32, %v52
    %v54 = vlaneseq
    %v55 = vshrl.u32 %v54, 7
    %v56 = vsub.s32 5, %v55
    %v57 = vrot.slane %v32, %v56
    %v58 = vlaneseq
    %v59 = vshrl.u32 %v58, 7
    %v60 = vsub.s32 6, %v59
    %v61 = vrot.slane %v32, %v60
    %v62 = vlaneseq
    %v63 = vshrl.u32 %v62, 7
    %v64 = vsub.s32 7, %v63
    %v65 = vrot.slane %v32, %v64
    %v66 = vcombine.low %v37, %v41
    %v67 = vcombine.low %v45, %v49
    %v68 = vcombine.low %v53, %v57
    %v69 = vcombine.low %v61, %v65
    %v71 = vunpack.c.l.s4 1966171168
    %v72 = vunpack.c.0.s8 %v71
    %v73 = vlaneseq
    %v74 = vshrl.u32 %v73, 7
    %v75 = vsub.s32 %v72, %v74
    %v76 = vrot.slane %v66, %v75
    %v78 = vunpack.c.l.s4 1966171168
    %v79 = vunpack.c.0.s8 %v78
    %v80 = vlaneseq
    %v81 = vshrl.u32 %v80, 7
    %v82 = vsub.s32 %v79, %v81
    %v83 = vrot.slane %v67, %v82
    %v85 = vunpack.c.l.s4 1966171168
    %v86 = vunpack.c.0.s8 %v85
    %v87 = vlaneseq
    %v88 = vshrl.u32 %v87, 7
    %v89 = vsub.s32 %v86, %v88
    %v90 = vrot.slane %v68, %v89
    %v92 = vunpack.c.l.s4 1966171168
    %v93 = vunpack.c.0.s8 %v92
    %v94 = vlaneseq
    %v95 = vshrl.u32 %v94, 7
    %v96 = vsub.s32 %v93, %v95
    %v97 = vrot.slane %v69, %v96
    %v98 = vcombine.low %v76, %v83
    %v99 = vcombine.low %v90, %v97
    %v101 = vunpack.c.l.s4 1966171168
    %v102 = vunpack.c.0.s8 %v101
    %v103 = vlaneseq
    %v104 = vshrl.u32 %v103, 7
    %v105 = vsub.s32 %v102, %v104
    %v106 = vrot.slane %v98, %v105
    %v108 = vunpack.c.l.s4 1966171168
    %v109 = vunpack.c.0.s8 %v108
    %v110 = vlaneseq
    %v111 = vshrl.u32 %v110, 7
    %v112 = vsub.s32 %v109, %v111
    %v113 = vrot.slane %v99, %v112
    %v114 = vcombine.low %v106, %v113
    %115 = vset.pattern.permute.xlu0 0
    %116 = vperm.xlu0 %115, %v114
    %v117 = vpop.permute.xlu0 %116
    %v118 = vlaneseq
    %v119 = vand.u32 %v118, 127
    %v120 = vlaneseq
    %v121 = vshrl.u32 %v120, 7
    %v122 = vsub.s32 %v119, %v121
    %v123 = vrot.slane %v117, %v122
    %v125 = vunpack.c.l.s4 1966171168
    %v126 = vunpack.c.0.s8 %v125
    %v127 = vlaneseq
    %v128 = vshrl.u32 %v127, 7
    %v129 = vsub.s32 %v126, %v128
    %v130 = vrot.slane %v123, %v129
    %v132 = vunpack.c.l.s4 1966171168
    %v133 = vunpack.c.0.s8 %v132
    %v134 = vlaneseq
    %v135 = vshrl.u32 %v134, 7
    %v136 = vsub.s32 %v133, %v135
    %v137 = vrot.slane %v130, %v136
    %v139 = vadd.f32 %v28, %v137
    %vm140 = vcmask 57344
    %141 = vst.msk [vmem:[#allocation2] sm:$0x1] %vm140, %v139
    // Predicated region
    $region14: #{tpu_custom_call.1} parent=1 // pred_check
      %p142 = pneg %p21
    $region15: #{tpu_custom_call.1} parent=1 // pred_check_branch
      %144 = sbr.rel (%p142) target = $region17
    $region16: #{tpu_custom_call.1} parent=1 // pred_region
      %v145 = vld [vmem:[#allocation2] sm:$0x1]
      %v146 = vmul.f32 %v145, 0.0625
      %147 = vst.msk [vmem:[#allocation6] sm:$0x1] %vm140, %v146
    $region17: #{tpu_custom_call.1} parent=1 // pred_fallthru
      _
    // Predicated region
    $region18: #{tpu_custom_call.1} parent=1 // pred_check
      _
    $region19: #{tpu_custom_call.1} parent=1 // pred_check_branch
      %149 = sbr.rel (0) target = $region21
    $region20: #{tpu_custom_call.1} parent=1 // pred_region
      %s151 = ssub.s32 16, 16
      %152 = vsyncadd [#allocation5], %s151
      %s154 = sshll.u32 [#allocation6], 4
      %s155 = int_to_ptr.vmem [resolvable:$true] %s154
      %157 = dma.vmem_to_hbm [thread:$0]  %s155, 16, %s1, [#allocation5]
    $region21: #{tpu_custom_call.1} parent=1 // pred_fallthru
      _
    // Predicated region
    $region22: #{tpu_custom_call.1} parent=1 // pred_check
      _
    $region23: #{tpu_custom_call.1} parent=1 // pred_check_branch
      %159 = sbr.rel (0) target = $region25
    $region24: #{tpu_custom_call.1} parent=1 // pred_region
      %160 = dma.done [#allocation5], 16
    $region25: #{tpu_custom_call.1} parent=1 // pred_fallthru
      _
    %161 = vsyncpa [#allocation4], 1
    %162 = vsyncpa [#allocation5], 1

</llo_original>
